<compile_context>
chip_gen: v6e
topology: v6e:2x2x1
jax: 0.10.0
libtpu: 0.0.40
codegen_flags: <defaults>
</compile_context>

<pallas_src>
import jax
import jax.numpy as jnp
from jax.experimental import pallas as pl
from jax.experimental.pallas import tpu as pltpu


TILE_B = 1024   # batch tile; amortizes per-grid-step overhead, tiny VMEM cost


def _critic_kernel(xs_ref, xa_ref, w1s_ref, w1a_ref, b1_ref, w2_ref, b2_ref,
                   w3t_ref, b3_ref, o_ref):
    dt = w1s_ref.dtype  # bf16 weight dtype; casts happen in-kernel (no HBM copy)

    # fcs1 (split over state/action halves of w1) + relu; f32 accumulation.
    h1 = jnp.dot(xs_ref[...].astype(dt), w1s_ref[...],
                 preferred_element_type=jnp.float32)
    h1 = h1 + jnp.dot(xa_ref[...].astype(dt), w1a_ref[...],
                      preferred_element_type=jnp.float32)
    h1 = jnp.maximum(h1 + b1_ref[...], 0.0)

    # fc2 + relu
    h2 = jnp.dot(h1.astype(dt), w2_ref[...], preferred_element_type=jnp.float32)
    h2 = jnp.maximum(h2 + b2_ref[...], 0.0)

    # fc3 value head: VPU multiply + lane reduction (avoids an N=1 MXU matmul
    # and any padded/amplified writeback); output block is (tile_b, 1).
    v = jnp.sum(h2 * w3t_ref[...].astype(jnp.float32), axis=-1, keepdims=True)
    o_ref[...] = (v + b3_ref[...]).astype(o_ref.dtype)


def critic_forward(state, action, params, *, tile_b=TILE_B):
    """Fused Critic forward pass.

    state:  (B, state_size * num_agents)  float32
    action: (B, action_size * num_agents) float32
    params: w1 ((S+A)*num_agents, F1) bf16, b1 (1, F1) f32,
            w2 (F1, F2) bf16,           b2 (1, F2) f32,
            w3 (F2, 1)  bf16,           b3 (1, 1)  f32
    returns (B, 1) float32
    """
    B, S = state.shape
    _, A = action.shape
    w1 = params["w1"]
    F1 = w1.shape[1]
    F2 = params["w2"].shape[1]

    # Split w1 into its state/action halves (tiny, once per call) so the
    # wrapper never materializes cat(state, action).
    w1s, w1a = w1[:S], w1[S:]
    # Value-head weights transposed to (1, F2) for the in-kernel lane reduce.
    w3t = params["w3"].T

    # No batch padding: ragged last block is masked by Pallas on write.
    tb = B if B <= tile_b else tile_b          # full-dim block OK for small B
    grid_b = pl.cdiv(B, tb)

    const = lambda i: (0, 0)   # weights/biases: same block every step -> resident
    w_bytes = sum(int(v.size) * v.dtype.itemsize for v in params.values())
    cost = pl.CostEstimate(
        flops=2 * B * ((S + A) * F1 + F1 * F2 + F2),
        transcendentals=0,
        bytes_accessed=B * (S + A) * 4 + B * 4 + w_bytes,
    )

    out = pl.pallas_call(
        _critic_kernel,
        out_shape=jax.ShapeDtypeStruct((B, 1), jnp.float32),
        grid=(grid_b,),
        in_specs=[
            pl.BlockSpec((tb, S), lambda i: (i, 0)),    # state tile (pipelined)
            pl.BlockSpec((tb, A), lambda i: (i, 0)),    # action tile (pipelined)
            pl.BlockSpec((S, F1), const),               # w1 (state half)
            pl.BlockSpec((A, F1), const),               # w1 (action half)
            pl.BlockSpec((1, F1), const),               # b1
            pl.BlockSpec((F1, F2), const),              # w2
            pl.BlockSpec((1, F2), const),               # b2
            pl.BlockSpec((1, F2), const),               # w3^T
            pl.BlockSpec((1, 1), const),                # b3
        ],
        out_specs=pl.BlockSpec((tb, 1), lambda i: (i, 0)),
        compiler_params=pltpu.CompilerParams(
            dimension_semantics=("parallel",),          # v7x: shard batch over 2 TCs
        ),
        cost_estimate=cost,
    )(state, action, w1s, w1a, params["b1"], params["w2"], params["b2"],
      w3t, params["b3"])

    return out


def init_critic_params(key, state_size, action_size, num_agents,
                       fcs1_units=256, fc2_units=128):
    """Init mirroring nn.Linear default (uniform +/- 1/sqrt(fan_in)).

    Weights stored pre-transposed as (in, out) in bf16; biases (1, out) f32.
    """
    def linear(k, fan_in, fan_out):
        kw, kb = jax.random.split(k)
        bound = 1.0 / jnp.sqrt(fan_in)
        w = jax.random.uniform(kw, (fan_in, fan_out), jnp.float32, -bound, bound)
        b = jax.random.uniform(kb, (1, fan_out), jnp.float32, -bound, bound)
        return w.astype(jnp.bfloat16), b

    in_dim = (state_size + action_size) * num_agents
    k1, k2, k3 = jax.random.split(key, 3)
    w1, b1 = linear(k1, in_dim, fcs1_units)
    w2, b2 = linear(k2, fcs1_units, fc2_units)
    w3, b3 = linear(k3, fc2_units, 1)
    return {"w1": w1, "b1": b1, "w2": w2, "b2": b2, "w3": w3, "b3": b3}


def critic_reference(state, action, p):
    """Pure-JAX reference mirroring the kernel's bf16/f32 precision choices."""
    # TODO(synk): bf16 weights/operand casts track the kernel, not a pure-f32
    # torch Critic (~1e-2 rel. difference if exact torch parity is required).
    dt = p["w1"].dtype
    S = state.shape[1]
    h1 = (jnp.dot(state.astype(dt), p["w1"][:S], preferred_element_type=jnp.float32)
          + jnp.dot(action.astype(dt), p["w1"][S:], preferred_element_type=jnp.float32))
    h1 = jnp.maximum(h1 + p["b1"], 0.0)
    h2 = jnp.dot(h1.astype(dt), p["w2"], preferred_element_type=jnp.float32)
    h2 = jnp.maximum(h2 + p["b2"], 0.0)
    v = jnp.sum(h2 * p["w3"].T.astype(jnp.float32), axis=-1, keepdims=True)
    return v + p["b3"]


if __name__ == "__main__":
    key = jax.random.PRNGKey(0)
    k_params, k_state, k_action = jax.random.split(key, 3)

    batch, state_size, action_size, num_agents = 2, 8, 2, 2
    params = init_critic_params(k_params, state_size, action_size, num_agents,
                                fcs1_units=256, fc2_units=128)
    state = jax.random.normal(
        k_state, (batch, state_size * num_agents), jnp.float32)
    action = jax.random.normal(
        k_action, (batch, action_size * num_agents), jnp.float32)

    out = jax.jit(critic_forward)(state, action, params)
    out = jax.block_until_ready(out)

    ref = critic_reference(state, action, params)
    assert out.shape == (batch, 1)
    assert jnp.allclose(out, ref, atol=1e-3, rtol=1e-3)

    print("KERNEL_OK")
</pallas_src>

<mosaic_0001>
module attributes {stable_mosaic.version = 11 : i64} {
  func.func @_critic_kernel(%arg0: i32, %arg1: memref<2x16xf32, #tpu.memory_space<vmem>>, %arg2: memref<2x4xf32, #tpu.memory_space<vmem>>, %arg3: memref<16x256xbf16, #tpu.memory_space<vmem>>, %arg4: memref<4x256xbf16, #tpu.memory_space<vmem>>, %arg5: memref<1x256xf32, #tpu.memory_space<vmem>>, %arg6: memref<256x128xbf16, #tpu.memory_space<vmem>>, %arg7: memref<1x128xf32, #tpu.memory_space<vmem>>, %arg8: memref<1x128xbf16, #tpu.memory_space<vmem>>, %arg9: memref<1x1xf32, #tpu.memory_space<vmem>>, %arg10: memref<2x1xf32, #tpu.memory_space<vmem>>) attributes {dimension_semantics = [#tpu.dimension_semantics<parallel>], iteration_bounds = array<i64: 1>, scalar_prefetch = 0 : i64, scratch_operands = 0 : i64, tpu.core_type = #tpu.core_type<tc>, window_params = [{transform_indices = @transform_0, window_bounds = array<i64: 2, 16>}, {transform_indices = @transform_1, window_bounds = array<i64: 2, 4>}, {pipeline_mode = #tpu.pipeline_mode<synchronous>, transform_indices = @transform_2, window_bounds = array<i64: 16, 256>}, {pipeline_mode = #tpu.pipeline_mode<synchronous>, transform_indices = @transform_3, window_bounds = array<i64: 4, 256>}, {pipeline_mode = #tpu.pipeline_mode<synchronous>, transform_indices = @transform_4, window_bounds = array<i64: 1, 256>}, {pipeline_mode = #tpu.pipeline_mode<synchronous>, transform_indices = @transform_5, window_bounds = array<i64: 256, 128>}, {pipeline_mode = #tpu.pipeline_mode<synchronous>, transform_indices = @transform_6, window_bounds = array<i64: 1, 128>}, {pipeline_mode = #tpu.pipeline_mode<synchronous>, transform_indices = @transform_7, window_bounds = array<i64: 1, 128>}, {pipeline_mode = #tpu.pipeline_mode<synchronous>, transform_indices = @transform_8, window_bounds = array<i64: 1, 1>}, {transform_indices = @transform_9, window_bounds = array<i64: 2, 1>}]} {
    %c0 = arith.constant 0 : index
    %c0_0 = arith.constant 0 : index
    %0 = vector.load %arg1[%c0, %c0_0] : memref<2x16xf32, #tpu.memory_space<vmem>>, vector<2x16xf32>
    %1 = arith.truncf %0 : vector<2x16xf32> to vector<2x16xbf16>
    %c0_1 = arith.constant 0 : index
    %c0_2 = arith.constant 0 : index
    %2 = vector.load %arg3[%c0_1, %c0_2] : memref<16x256xbf16, #tpu.memory_space<vmem>>, vector<16x256xbf16>
    %cst = arith.constant dense<0.000000e+00> : vector<2x256xf32>
    %3 = tpu.matmul %1, %2, %cst {dimension_numbers = #tpu.dot_dimension_numbers<[1], [0], [0], [1], [0, 0, 1, 1], [], []>} : vector<2x16xbf16>, vector<16x256xbf16>, vector<2x256xf32> -> vector<2x256xf32>
    %c0_3 = arith.constant 0 : index
    %c0_4 = arith.constant 0 : index
    %4 = vector.load %arg2[%c0_3, %c0_4] : memref<2x4xf32, #tpu.memory_space<vmem>>, vector<2x4xf32>
    %5 = arith.truncf %4 : vector<2x4xf32> to vector<2x4xbf16>
    %c0_5 = arith.constant 0 : index
    %c0_6 = arith.constant 0 : index
    %6 = vector.load %arg4[%c0_5, %c0_6] : memref<4x256xbf16, #tpu.memory_space<vmem>>, vector<4x256xbf16>
    %cst_7 = arith.constant dense<0.000000e+00> : vector<2x256xf32>
    %7 = tpu.matmul %5, %6, %cst_7 {dimension_numbers = #tpu.dot_dimension_numbers<[1], [0], [0], [1], [0, 0, 1, 1], [], []>} : vector<2x4xbf16>, vector<4x256xbf16>, vector<2x256xf32> -> vector<2x256xf32>
    %8 = arith.addf %3, %7 : vector<2x256xf32>
    %c0_8 = arith.constant 0 : index
    %c0_9 = arith.constant 0 : index
    %9 = vector.load %arg5[%c0_8, %c0_9] : memref<1x256xf32, #tpu.memory_space<vmem>>, vector<1x256xf32>
    %10 = vector.broadcast %9 : vector<1x256xf32> to vector<2x256xf32>
    %11 = arith.addf %8, %10 : vector<2x256xf32>
    %cst_10 = arith.constant 0.000000e+00 : f32
    %12 = vector.broadcast %cst_10 : f32 to vector<2x256xf32>
    %13 = arith.maximumf %11, %12 : vector<2x256xf32>
    %14 = arith.truncf %13 : vector<2x256xf32> to vector<2x256xbf16>
    %c0_11 = arith.constant 0 : index
    %c0_12 = arith.constant 0 : index
    %15 = vector.load %arg6[%c0_11, %c0_12] : memref<256x128xbf16, #tpu.memory_space<vmem>>, vector<256x128xbf16>
    %cst_13 = arith.constant dense<0.000000e+00> : vector<2x128xf32>
    %16 = tpu.matmul %14, %15, %cst_13 {dimension_numbers = #tpu.dot_dimension_numbers<[1], [0], [0], [1], [0, 0, 1, 1], [], []>} : vector<2x256xbf16>, vector<256x128xbf16>, vector<2x128xf32> -> vector<2x128xf32>
    %c0_14 = arith.constant 0 : index
    %c0_15 = arith.constant 0 : index
    %17 = vector.load %arg7[%c0_14, %c0_15] : memref<1x128xf32, #tpu.memory_space<vmem>>, vector<1x128xf32>
    %18 = vector.broadcast %17 : vector<1x128xf32> to vector<2x128xf32>
    %19 = arith.addf %16, %18 : vector<2x128xf32>
    %cst_16 = arith.constant 0.000000e+00 : f32
    %20 = vector.broadcast %cst_16 : f32 to vector<2x128xf32>
    %21 = arith.maximumf %19, %20 : vector<2x128xf32>
    %c0_17 = arith.constant 0 : index
    %c0_18 = arith.constant 0 : index
    %22 = vector.load %arg8[%c0_17, %c0_18] : memref<1x128xbf16, #tpu.memory_space<vmem>>, vector<1x128xbf16>
    %23 = arith.extf %22 : vector<1x128xbf16> to vector<1x128xf32>
    %24 = vector.broadcast %23 : vector<1x128xf32> to vector<2x128xf32>
    %25 = arith.mulf %21, %24 : vector<2x128xf32>
    %cst_19 = arith.constant dense<0.000000e+00> : vector<2xf32>
    %26 = vector.multi_reduction <add>, %25, %cst_19 [1] : vector<2x128xf32> to vector<2xf32>
    %27 = vector.shape_cast %26 : vector<2xf32> to vector<2x1xf32>
    %c0_20 = arith.constant 0 : index
    %c0_21 = arith.constant 0 : index
    %28 = vector.load %arg9[%c0_20, %c0_21] : memref<1x1xf32, #tpu.memory_space<vmem>>, vector<1x1xf32>
    %29 = vector.broadcast %28 : vector<1x1xf32> to vector<2x1xf32>
    %30 = arith.addf %27, %29 : vector<2x1xf32>
    %c0_22 = arith.constant 0 : index
    %c0_23 = arith.constant 0 : index
    %31 = vector.load %arg10[%c0_22, %c0_23] : memref<2x1xf32, #tpu.memory_space<vmem>>, vector<2x1xf32>
    tpu.vector_store %arg10[%c0_22, %c0_23], %30 {strides = array<i32>} : memref<2x1xf32, #tpu.memory_space<vmem>>, vector<2x1xf32>,
    return
  }
  func.func @transform_0(%arg0: i32) -> (i32, i32) {
    %c0_i32 = arith.constant 0 : i32
    %c0_i32_0 = arith.constant 0 : i32
    return %arg0, %c0_i32 : i32, i32
  }
  func.func @transform_1(%arg0: i32) -> (i32, i32) {
    %c0_i32 = arith.constant 0 : i32
    %c0_i32_0 = arith.constant 0 : i32
    return %arg0, %c0_i32 : i32, i32
  }
  func.func @transform_2(%arg0: i32) -> (i32, i32) {
    %c0_i32 = arith.constant 0 : i32
    %c0_i32_0 = arith.constant 0 : i32
    %c0_i32_1 = arith.constant 0 : i32
    return %c0_i32, %c0_i32_0 : i32, i32
  }
  func.func @transform_3(%arg0: i32) -> (i32, i32) {
    %c0_i32 = arith.constant 0 : i32
    %c0_i32_0 = arith.constant 0 : i32
    %c0_i32_1 = arith.constant 0 : i32
    return %c0_i32, %c0_i32_0 : i32, i32
  }
  func.func @transform_4(%arg0: i32) -> (i32, i32) {
    %c0_i32 = arith.constant 0 : i32
    %c0_i32_0 = arith.constant 0 : i32
    %c0_i32_1 = arith.constant 0 : i32
    return %c0_i32, %c0_i32_0 : i32, i32
  }
  func.func @transform_5(%arg0: i32) -> (i32, i32) {
    %c0_i32 = arith.constant 0 : i32
    %c0_i32_0 = arith.constant 0 : i32
    %c0_i32_1 = arith.constant 0 : i32
    return %c0_i32, %c0_i32_0 : i32, i32
  }
  func.func @transform_6(%arg0: i32) -> (i32, i32) {
    %c0_i32 = arith.constant 0 : i32
    %c0_i32_0 = arith.constant 0 : i32
    %c0_i32_1 = arith.constant 0 : i32
    return %c0_i32, %c0_i32_0 : i32, i32
  }
  func.func @transform_7(%arg0: i32) -> (i32, i32) {
    %c0_i32 = arith.constant 0 : i32
    %c0_i32_0 = arith.constant 0 : i32
    %c0_i32_1 = arith.constant 0 : i32
    return %c0_i32, %c0_i32_0 : i32, i32
  }
  func.func @transform_8(%arg0: i32) -> (i32, i32) {
    %c0_i32 = arith.constant 0 : i32
    %c0_i32_0 = arith.constant 0 : i32
    %c0_i32_1 = arith.constant 0 : i32
    return %c0_i32, %c0_i32_0 : i32, i32
  }
  func.func @transform_9(%arg0: i32) -> (i32, i32) {
    %c0_i32 = arith.constant 0 : i32
    %c0_i32_0 = arith.constant 0 : i32
    return %arg0, %c0_i32 : i32, i32
  }
}

</mosaic_0001>

<llo_original>
// kernel: critic_forward.1
$region0: #{critic_forward.1}
  #allocation0 [shape = 'u32[]', space=smem, size = 0x4, offset = 0x4, fixed_abs, tag = 'smem constant byte address 0x4 - core index']
  #allocation1 [shape = 'u32[144,128]{1,0:T(1,128)}', space=vmem, size = 0x12000, scoped, tag = 'internal scratch']
  #allocation2 [shape = 'f32[1,1]{1,0:T(1,128)S(1)}', space=vmem, size = 0x200, scoped, tag = 'scoped memory for critic_forward.1']
  %s0 = inlined_call_operand.vmem [shape: f32[2,16], index: 0, kind: input, shape index: {}]
  %s1 = inlined_call_operand.vmem [shape: f32[2,4], index: 1, kind: input, shape index: {}]
  %s2 = inlined_call_operand.vmem [shape: bf16[16,256], index: 2, kind: input, shape index: {}]
  %s3 = inlined_call_operand.vmem [shape: bf16[4,256], index: 3, kind: input, shape index: {}]
  %s4 = inlined_call_operand.vmem [shape: f32[1,256], index: 4, kind: input, shape index: {}]
  %s5 = inlined_call_operand.hbm [shape: bf16[256,128], index: 5, kind: input, shape index: {}]
  %s6 = inlined_call_operand.vmem [shape: f32[1,128], index: 6, kind: input, shape index: {}]
  %s7 = inlined_call_operand.vmem [shape: bf16[1,128], index: 7, kind: input, shape index: {}]
  %s8 = inlined_call_operand.<no memory space> [shape: f32[1,1], index: 8, kind: input, shape index: {}]
  %s9 = inlined_call_operand.vmem [shape: f32[2,1], index: 9, kind: output, shape index: {}]
  %s10 = sld [smem:[#allocation0]]
  $region50: #{critic_forward.1} parent=0
    _
  %s12 = ssub.s32 1, %s10
  %s13 = scalar_select 0, %s12, %s10
  %v14 = vstv %s8
  %15 = vst [vmem:[#allocation2] sm:$0x1] %v14
  $region1: #{critic_forward.1} parent=0
    #allocation3 [shape = 'u8[65536]{0}', space=vmem, size = 0x10000, scoped, tag = 'input window, operand 5, single buffered']
    #allocation4 [shape = 's32[1]{0}', space=sflag, size = 0x4, scoped, tag = 'scoped memory for critic_forward.1']
    %16 = vsyncpa [#allocation4], 0
    // Predicated region
    $region2: #{critic_forward.1} parent=1 // pred_check
      _
    $region3: #{critic_forward.1} parent=1 // pred_check_branch
      %18 = sbr.rel (0) target = $region5
    $region4: #{critic_forward.1} parent=1 // pred_region
      _
    $region5: #{critic_forward.1} parent=1 // pred_fallthru
      _
    // Predicated region
    $region6: #{critic_forward.1} parent=1 // pred_check
      _
    $region7: #{critic_forward.1} parent=1 // pred_check_branch
      %20 = sbr.rel (0) target = $region9
    $region8: #{critic_forward.1} parent=1 // pred_region
      _
    $region9: #{critic_forward.1} parent=1 // pred_fallthru
      _
    // Predicated region
    $region10: #{critic_forward.1} parent=1 // pred_check
      _
    $region11: #{critic_forward.1} parent=1 // pred_check_branch
      %22 = sbr.rel (0) target = $region13
    $region12: #{critic_forward.1} parent=1 // pred_region
      _
    $region13: #{critic_forward.1} parent=1 // pred_fallthru
      _
    // Predicated region
    $region14: #{critic_forward.1} parent=1 // pred_check
      _
    $region15: #{critic_forward.1} parent=1 // pred_check_branch
      %24 = sbr.rel (0) target = $region17
    $region16: #{critic_forward.1} parent=1 // pred_region
      _
    $region17: #{critic_forward.1} parent=1 // pred_fallthru
      _
    // Predicated region
    $region18: #{critic_forward.1} parent=1 // pred_check
      _
    $region19: #{critic_forward.1} parent=1 // pred_check_branch
      %26 = sbr.rel (0) target = $region21
    $region20: #{critic_forward.1} parent=1 // pred_region
      _
    $region21: #{critic_forward.1} parent=1 // pred_fallthru
      _
    // Predicated region
    $region22: #{critic_forward.1} parent=1 // pred_check
      _
    $region23: #{critic_forward.1} parent=1 // pred_check_branch
      %28 = sbr.rel (0) target = $region25
    $region24: #{critic_forward.1} parent=1 // pred_region
      %s30 = ssub.s32 2048, 2048
      %31 = vsyncadd [#allocation4], %s30
      %s32 = sshll.u32 [#allocation3], 4
      %s33 = int_to_ptr.vmem [resolvable:$true] %s32
      %38 = dma.hbm_to_vmem [thread:$0]  %s5, 2048, %s33, [#allocation4], 64, 64, 4
    $region25: #{critic_forward.1} parent=1 // pred_fallthru
      _
    // Predicated region
    $region26: #{critic_forward.1} parent=1 // pred_check
      _
    $region27: #{critic_forward.1} parent=1 // pred_check_branch
      %40 = sbr.rel (0) target = $region29
    $region28: #{critic_forward.1} parent=1 // pred_region
      _
    $region29: #{critic_forward.1} parent=1 // pred_fallthru
      _
    // Predicated region
    $region30: #{critic_forward.1} parent=1 // pred_check
      _
    $region31: #{critic_forward.1} parent=1 // pred_check_branch
      %42 = sbr.rel (0) target = $region33
    $region32: #{critic_forward.1} parent=1 // pred_region
      _
    $region33: #{critic_forward.1} parent=1 // pred_fallthru
      _
    // Predicated region
    $region34: #{critic_forward.1} parent=1 // pred_check
      _
    $region35: #{critic_forward.1} parent=1 // pred_check_branch
      %44 = sbr.rel (0) target = $region37
    $region36: #{critic_forward.1} parent=1 // pred_region
      _
    $region37: #{critic_forward.1} parent=1 // pred_fallthru
      _
    // Predicated region
    $region38: #{critic_forward.1} parent=1 // pred_check
      _
    $region39: #{critic_forward.1} parent=1 // pred_check_branch
      %46 = sbr.rel (0) target = $region41
    $region40: #{critic_forward.1} parent=1 // pred_region
      %47 = dma.done [#allocation4], 2048
    $region41: #{critic_forward.1} parent=1 // pred_fallthru
      _
    %v49 = vld [vmem:[%s0] sm:$0x3]
    %v50 = vpack.c.bf16 %v49, %v49
    %v51 = vld [vmem:[%s2] sm:$0xff]
    %v52 = vld [vmem:[%s2 + $0x8] sm:$0xff]
    %v53 = vld [vmem:[%s1] sm:$0x3]
    %v54 = vpack.c.bf16 %v53, %v53
    %v55 = vld [vmem:[%s3] sm:$0xf]
    %v58 = vunpack.c.l.s4 1983009808
    %v59 = vunpack.c.0.s8 %v58
    %v60 = vlaneseq
    %v61 = vshrl.u32 %v60, 7
    %v62 = vsub.s32 %v59, %v61
    %v63 = vrot.slane %v55, %v62
    %v64 = vcombine.high %v63, %v63
    %vm65 = vcmask 31744
    %v67 = vsel %vm65, %v54, 0
    %vm69 = vcmask 1041408
    %v71 = vsel %vm69, %v63, 0
    %v74 = vsel %vm69, %v64, 0
    %76 = vmatprep.subr.bf16.mxu0 0
    %77 = vmatpush1.bf16.msra.mxu0 0
    %78 = vmatprep.subr.bf16.mxu0 0
    %79 = vmatpush1.bf16.msra.mxu0 0
    %80 = vmatprep.subr.bf16.mxu0 0
    %81 = vmatpush1.bf16.msra.mxu0 0
    %82 = vmatprep.subr.bf16.mxu0 0
    %83 = vmatpush1.bf16.msra.mxu0 0
    %84 = vmatprep.subr.bf16.mxu0 0
    %85 = vmatpush1.bf16.msra.mxu0 0
    %86 = vmatprep.subr.bf16.mxu0 0
    %87 = vmatpush1.bf16.msra.mxu0 0
    %88 = vmatprep.subr.bf16.mxu0 0
    %89 = vmatpush1.bf16.msra.mxu0 0
    %90 = vmatprep.subr.bf16.mxu0 %v74
    %91 = vmatpush1.bf16.msra.mxu0 %v71
    %92 = vmatprep.subr.bf16.mxu0 0
    %93 = vmatpush2.bf16.msra.mxu0 0
    %94 = vmatprep.subr.bf16.mxu0 0
    %95 = vmatpush2.bf16.msra.mxu0 0
    %96 = vmatprep.subr.bf16.mxu0 0
    %97 = vmatpush2.bf16.msra.mxu0 0
    %98 = vmatprep.subr.bf16.mxu0 0
    %99 = vmatpush2.bf16.msra.mxu0 0
    %100 = vmatprep.subr.bf16.mxu0 0
    %101 = vmatpush2.bf16.msra.mxu0 0
    %102 = vmatprep.subr.bf16.mxu0 0
    %103 = vmatpush2.bf16.msra.mxu0 0
    %104 = vmatprep.subr.bf16.mxu0 0
    %105 = vmatpush2.bf16.msra.mxu0 0
    %106 = vmatprep.subr.bf16.mxu0 0
    %107 = vmatpush2.bf16.msra.mxu0 0
    %108 = vmatprep.mubr.bf16.mxu0 0
    %109 = vmatmul.mubr.bf16.gmra.mxu0 %v67
    %v110 = vpop.f32.mrf.mxu0
    %v111 = vadd.f32 0.0, %v110
    %v112 = vpop.f32.mrf.mxu0
    %v113 = vadd.f32 0.0, %v112
    %v114 = vpop.f32.mrf.mxu0
    %v115 = vpop.f32.mrf.mxu0
    %116 = vdwg.mxu0
    %v119 = vunpack.c.l.b16 %v51
    %v120 = vunpack.c.h.b16 %v51
    %v121 = vunpack.c.l.b16 %v52
    %v122 = vunpack.c.h.b16 %v52
    %v123 = vpack.c.b16 %v121, %v119
    %v124 = vpack.c.b16 %v122, %v120
    %vm127 = vcmask 130048
    %v129 = vsel %vm127, %v50, 0
    %131 = vmatprep.subr.bf16.mxu0 0
    %132 = vmatpush1.bf16.msra.mxu0 0
    %133 = vmatprep.subr.bf16.mxu0 0
    %134 = vmatpush1.bf16.msra.mxu0 0
    %135 = vmatprep.subr.bf16.mxu0 0
    %136 = vmatpush1.bf16.msra.mxu0 0
    %137 = vmatprep.subr.bf16.mxu0 0
    %138 = vmatpush1.bf16.msra.mxu0 0
    %139 = vmatprep.subr.bf16.mxu0 0
    %140 = vmatpush1.bf16.msra.mxu0 0
    %141 = vmatprep.subr.bf16.mxu0 0
    %142 = vmatpush1.bf16.msra.mxu0 0
    %143 = vmatprep.subr.bf16.mxu0 0
    %144 = vmatpush1.bf16.msra.mxu0 0
    %145 = vmatprep.subr.bf16.mxu0 %v124
    %146 = vmatpush1.bf16.msra.mxu0 %v123
    %147 = vmatprep.subr.bf16.mxu0 0
    %148 = vmatpush2.bf16.msra.mxu0 0
    %149 = vmatprep.subr.bf16.mxu0 0
    %150 = vmatpush2.bf16.msra.mxu0 0
    %151 = vmatprep.subr.bf16.mxu0 0
    %152 = vmatpush2.bf16.msra.mxu0 0
    %153 = vmatprep.subr.bf16.mxu0 0
    %154 = vmatpush2.bf16.msra.mxu0 0
    %155 = vmatprep.subr.bf16.mxu0 0
    %156 = vmatpush2.bf16.msra.mxu0 0
    %157 = vmatprep.subr.bf16.mxu0 0
    %158 = vmatpush2.bf16.msra.mxu0 0
    %159 = vmatprep.subr.bf16.mxu0 0
    %160 = vmatpush2.bf16.msra.mxu0 0
    %161 = vmatprep.subr.bf16.mxu0 0
    %162 = vmatpush2.bf16.msra.mxu0 0
    %163 = vmatprep.mubr.bf16.mxu0 0
    %164 = vmatmul.mubr.bf16.gmra.mxu0 %v129
    %v165 = vpop.f32.mrf.mxu0
    %v166 = vadd.f32 %v111, %v165
    %v167 = vpop.f32.mrf.mxu0
    %v168 = vadd.f32 %v113, %v167
    %v169 = vpop.f32.mrf.mxu0
    %v170 = vpop.f32.mrf.mxu0
    %171 = vdwg.mxu0
    %v172 = vld [vmem:[%s4] sm:$0x3]
    %v174 = vlaneseq
    %v175 = vshrl.u32 %v174, 7
    %v176 = vsub.s32 0, %v175
    %v177 = vrot.slane %v172, %v176
    %v178 = vlaneseq
    %v179 = vshrl.u32 %v178, 7
    %v180 = vsub.s32 1, %v179
    %v181 = vrot.slane %v172, %v180
    %v184 = vadd.f32 %v166, %v177
    %v185 = vadd.f32 %v168, %v181
    %v186 = vmax.f32 %v184, 0.0
    %v187 = vmax.f32 %v185, 0.0
    %v188 = vpack.c.bf16 %v186, %v186
    %v189 = vpack.c.bf16 %v187, %v187
    %v190 = vld [vmem:[#allocation3] sm:$0xf]
    %v191 = vld [vmem:[#allocation3 + $0x4] sm:$0xf]
    %v192 = vld [vmem:[#allocation3 + $0x8] sm:$0xf]
    %v193 = vld [vmem:[#allocation3 + $0xc] sm:$0xf]
    %v194 = vld [vmem:[#allocation3 + $0x10] sm:$0xf]
    %v195 = vld [vmem:[#allocation3 + $0x14] sm:$0xf]
    %v196 = vld [vmem:[#allocation3 + $0x18] sm:$0xf]
    %v197 = vld [vmem:[#allocation3 + $0x1c] sm:$0xf]
    %v198 = vld [vmem:[#allocation3 + $0x20] sm:$0xf]
    %v199 = vld [vmem:[#allocation3 + $0x24] sm:$0xf]
    %v200 = vld [vmem:[#allocation3 + $0x28] sm:$0xf]
    %v201 = vld [vmem:[#allocation3 + $0x2c] sm:$0xf]
    %v202 = vld [vmem:[#allocation3 + $0x30] sm:$0xf]
    %v203 = vld [vmem:[#allocation3 + $0x34] sm:$0xf]
    %v204 = vld [vmem:[#allocation3 + $0x38] sm:$0xf]
    %v205 = vld [vmem:[#allocation3 + $0x3c] sm:$0xf]
    %v206 = vld [vmem:[#allocation3 + $0x40] sm:$0xf]
    %v207 = vld [vmem:[#allocation3 + $0x44] sm:$0xf]
    %v208 = vld [vmem:[#allocation3 + $0x48] sm:$0xf]
    %v209 = vld [vmem:[#allocation3 + $0x4c] sm:$0xf]
    %v210 = vld [vmem:[#allocation3 + $0x50] sm:$0xf]
    %v211 = vld [vmem:[#allocation3 + $0x54] sm:$0xf]
    %v212 = vld [vmem:[#allocation3 + $0x58] sm:$0xf]
    %v213 = vld [vmem:[#allocation3 + $0x5c] sm:$0xf]
    %v214 = vld [vmem:[#allocation3 + $0x60] sm:$0xf]
    %v215 = vld [vmem:[#allocation3 + $0x64] sm:$0xf]
    %v216 = vld [vmem:[#allocation3 + $0x68] sm:$0xf]
    %v217 = vld [vmem:[#allocation3 + $0x6c] sm:$0xf]
    %v218 = vld [vmem:[#allocation3 + $0x70] sm:$0xf]
    %v219 = vld [vmem:[#allocation3 + $0x74] sm:$0xf]
    %v220 = vld [vmem:[#allocation3 + $0x78] sm:$0xf]
    %v221 = vld [vmem:[#allocation3 + $0x7c] sm:$0xf]
    %v222 = vld [vmem:[%s6] sm:$0x1]
    %v224 = vlaneseq
    %v225 = vshrl.u32 %v224, 7
    %v226 = vsub.s32 0, %v225
    %v227 = vrot.slane %v222, %v226
    %v261 = vunpack.c.l.b16 %v190
    %v262 = vunpack.c.l.b16 %v191
    %v263 = vunpack.c.l.b16 %v192
    %v264 = vunpack.c.l.b16 %v193
    %v265 = vunpack.c.l.b16 %v194
    %v266 = vunpack.c.l.b16 %v195
    %v267 = vunpack.c.l.b16 %v196
    %v268 = vunpack.c.l.b16 %v197
    %v269 = vunpack.c.l.b16 %v198
    %v270 = vunpack.c.l.b16 %v199
    %v271 = vunpack.c.l.b16 %v200
    %v272 = vunpack.c.l.b16 %v201
    %v273 = vunpack.c.l.b16 %v202
    %v274 = vunpack.c.l.b16 %v203
    %v275 = vunpack.c.l.b16 %v204
    %v276 = vunpack.c.l.b16 %v205
    %v277 = vunpack.c.l.b16 %v206
    %v278 = vunpack.c.l.b16 %v207
    %v279 = vunpack.c.l.b16 %v208
    %v280 = vunpack.c.l.b16 %v209
    %v281 = vunpack.c.l.b16 %v210
    %v282 = vunpack.c.l.b16 %v211
    %v283 = vunpack.c.l.b16 %v212
    %v284 = vunpack.c.l.b16 %v213
    %v285 = vunpack.c.l.b16 %v214
    %v286 = vunpack.c.l.b16 %v215
    %v287 = vunpack.c.l.b16 %v216
    %v288 = vunpack.c.l.b16 %v217
    %v289 = vunpack.c.l.b16 %v218
    %v290 = vunpack.c.l.b16 %v219
    %v291 = vunpack.c.l.b16 %v220
    %v292 = vunpack.c.l.b16 %v221
    %v293 = vpack.c.b16 %v262, %v261
    %v294 = vpack.c.b16 %v264, %v263
    %v295 = vpack.c.b16 %v266, %v265
    %v296 = vpack.c.b16 %v268, %v267
    %v297 = vpack.c.b16 %v270, %v269
    %v298 = vpack.c.b16 %v272, %v271
    %v299 = vpack.c.b16 %v274, %v273
    %v300 = vpack.c.b16 %v276, %v275
    %v301 = vpack.c.b16 %v278, %v277
    %v302 = vpack.c.b16 %v280, %v279
    %v303 = vpack.c.b16 %v282, %v281
    %v304 = vpack.c.b16 %v284, %v283
    %v305 = vpack.c.b16 %v286, %v285
    %v306 = vpack.c.b16 %v288, %v287
    %v307 = vpack.c.b16 %v290, %v289
    %v308 = vpack.c.b16 %v292, %v291
    %325 = vmatprep.subr.bf16.mxu0 0
    %326 = vmatpush1.bf16.msra.mxu0 %v300
    %327 = vmatprep.subr.bf16.mxu0 0
    %328 = vmatpush1.bf16.msra.mxu0 %v299
    %329 = vmatprep.subr.bf16.mxu0 0
    %330 = vmatpush1.bf16.msra.mxu0 %v298
    %331 = vmatprep.subr.bf16.mxu0 0
    %332 = vmatpush1.bf16.msra.mxu0 %v297
    %333 = vmatprep.subr.bf16.mxu0 0
    %334 = vmatpush1.bf16.msra.mxu0 %v296
    %335 = vmatprep.subr.bf16.mxu0 0
    %336 = vmatpush1.bf16.msra.mxu0 %v295
    %337 = vmatprep.subr.bf16.mxu0 0
    %338 = vmatpush1.bf16.msra.mxu0 %v294
    %339 = vmatprep.subr.bf16.mxu0 0
    %340 = vmatpush1.bf16.msra.mxu0 %v293
    %341 = vmatprep.subr.bf16.mxu0 0
    %342 = vmatpush2.bf16.msra.mxu0 %v308
    %343 = vmatprep.subr.bf16.mxu0 0
    %344 = vmatpush2.bf16.msra.mxu0 %v307
    %345 = vmatprep.subr.bf16.mxu0 0
    %346 = vmatpush2.bf16.msra.mxu0 %v306
    %347 = vmatprep.subr.bf16.mxu0 0
    %348 = vmatpush2.bf16.msra.mxu0 %v305
    %349 = vmatprep.subr.bf16.mxu0 0
    %350 = vmatpush2.bf16.msra.mxu0 %v304
    %351 = vmatprep.subr.bf16.mxu0 0
    %352 = vmatpush2.bf16.msra.mxu0 %v303
    %353 = vmatprep.subr.bf16.mxu0 0
    %354 = vmatpush2.bf16.msra.mxu0 %v302
    %355 = vmatprep.subr.bf16.mxu0 0
    %356 = vmatpush2.bf16.msra.mxu0 %v301
    %357 = vmatprep.mubr.bf16.mxu0 %v189
    %358 = vmatmul.mubr.bf16.gmra.mxu0 %v188
    %v359 = vpop.f32.mrf.mxu0
    %v360 = vadd.f32 %v227, %v359
    %v361 = vpop.f32.mrf.mxu0
    %v362 = vpop.f32.mrf.mxu0
    %v363 = vpop.f32.mrf.mxu0
    %364 = vdwg.mxu0
    %v365 = vmax.f32 %v360, 0.0
    %v366 = vld [vmem:[%s7] sm:$0x1]
    %v367 = vunpack.c.l.bf16 %v366
    %v368 = vlaneseq
    %v369 = vshrl.u32 %v368, 7
    %v370 = vsub.s32 0, %v369
    %v371 = vrot.slane %v367, %v370
    %v372 = vmul.f32 %v365, %v371
    %v373 = vsel %vm69, %v372, 0.0
    %374 = vadd.xlane.f32.xlu0 %v373
    %v375 = vpop.xlane.xlu0 %374
    %v376 = vld [vmem:[#allocation2] sm:$0x1]
    %v378 = vlaneseq
    %v379 = vshrl.u32 %v378, 7
    %v380 = vsub.s32 0, %v379
    %v381 = vrot.slane %v376, %v380
    %v383 = vadd.f32 %v375, %v381
    %vm384 = vcmask 1024
    %385 = vst.msk [vmem:[%s9] sm:$0x3] %vm384, %v383
    // Predicated region
    $region42: #{critic_forward.1} parent=1 // pred_check
      _
    $region43: #{critic_forward.1} parent=1 // pred_check_branch
      %387 = sbr.rel (0) target = $region45
    $region44: #{critic_forward.1} parent=1 // pred_region
      _
    $region45: #{critic_forward.1} parent=1 // pred_fallthru
      _
    // Predicated region
    $region46: #{critic_forward.1} parent=1 // pred_check
      _
    $region47: #{critic_forward.1} parent=1 // pred_check_branch
      %389 = sbr.rel (0) target = $region49
    $region48: #{critic_forward.1} parent=1 // pred_region
      _
    $region49: #{critic_forward.1} parent=1 // pred_fallthru
      _
    %390 = vsyncpa [#allocation4], 1

</llo_original>
